<compile_context>
chip_gen: v6e
topology: v6e:2x2x1
jax: 0.10.0
libtpu: 0.0.40
codegen_flags: <defaults>
</compile_context>

<pallas_src>
import functools

import jax
import jax.numpy as jnp
from jax.experimental import pallas as pl
from jax.experimental.pallas import tpu as pltpu

_LANE = 128
_K_SPLIT_THRESHOLD = 4096          # add a K grid axis above this


def _round_up(x: int, m: int) -> int:
    return (x + m - 1) // m * m


def _cdiv(a: int, b: int) -> int:
    return -(-a // b)


def _vmem_config():
    """Generation-aware VMEM sizing. Returns (limit, tile_budget, max_tile_m)."""
    cap = 64 * 1024 * 1024
    try:
        info = pltpu.get_tpu_info()
        cap = int(getattr(info, "vmem_capacity_bytes", cap)) or cap
    except Exception:
        pass
    if cap >= 96 * 1024 * 1024:            # v5e / v6e: 128 MiB physical VMEM
        limit, max_tile_m = 64 * 1024 * 1024, 2048
    else:                                   # v7x: 64 MiB physical per TC
        limit, max_tile_m = 32 * 1024 * 1024, 1024
    return limit, (3 * limit) // 4, max_tile_m


# --------------------------------------------------------------------------
# Kernels
# --------------------------------------------------------------------------

def _fused_kernel(x_ref, w_ref, b_ref, o_ref):
    """grid = (M, N), single K block: one MXU matmul + f32 bias epilogue."""
    o_ref[...] = (jnp.dot(x_ref[...], w_ref[...],
                          preferred_element_type=jnp.float32)
                  + b_ref[...]).astype(o_ref.dtype)


def _accumulate_and_finalize(part, b_ref, o_ref, acc_ref):
    """Shared K-axis accumulate (direct store at k == 0) + bias finalize."""
    k = pl.program_id(2)

    @pl.when(k == 0)
    def _first():
        acc_ref[...] = part

    @pl.when(k != 0)
    def _rest():
        acc_ref[...] += part

    @pl.when(k == pl.num_programs(2) - 1)
    def _finalize():
        o_ref[...] = (acc_ref[...] + b_ref[...]).astype(o_ref.dtype)


def _ksplit_kernel(x_ref, w_ref, b_ref, o_ref, acc_ref):
    """grid = (M, N, K); weight streamed per (k, j) block."""
    part = jnp.dot(x_ref[...], w_ref[...], preferred_element_type=jnp.float32)
    _accumulate_and_finalize(part, b_ref, o_ref, acc_ref)


def _ksplit_resident_kernel(x_ref, w_ref, b_ref, o_ref, acc_ref, *, tile_k):
    """grid = (M, 1, K); whole weight resident in VMEM, sliced along K here."""
    k = pl.program_id(2)
    start = pl.multiple_of(k * tile_k, _LANE)
    part = jnp.dot(x_ref[pl.ds(0, x_ref.shape[0]), :] if False else x_ref[...],
                   w_ref[pl.ds(start, tile_k), :],
                   preferred_element_type=jnp.float32)
    _accumulate_and_finalize(part, b_ref, o_ref, acc_ref)


# --------------------------------------------------------------------------
# Tiling selection
# --------------------------------------------------------------------------

def _select_tiles(batch, k_dim, n_pad, x_itemsize, w_itemsize, out_itemsize,
                  vmem_budget, max_tile_m):
    """Pick (tile_m, tile_k, tile_n, weight_resident) from a VMEM budget.

    Per-step VMEM (bytes), double-buffered where pipelined:
        x      : 2 * tile_m * tile_k * x_itemsize
        weight : 2 * tile_k * tile_n * w_itemsize   (or full K*n_pad if resident)
        bias   : 2 * tile_n * 4
        out    : 2 * tile_m * tile_n * out_itemsize
        acc    :     tile_m * tile_n * 4            (only when grid_k > 1)
    """
    row_mult = 16 if x_itemsize == 2 else 8     # sublane packing (bf16 vs f32)

    # --- K (contraction) tiling: only split large, lane-aligned K. ---------
    if k_dim > _K_SPLIT_THRESHOLD and k_dim % _LANE == 0:
        tile_k = 2048
        while k_dim % tile_k:
            tile_k //= 2                        # always reaches a 128 multiple
    else:
        tile_k = k_dim
    grid_k = k_dim // tile_k

    # --- N tiling: keep the (double-buffered) weight block bounded. --------
    tile_n = n_pad
    while tile_n > _LANE and 2 * tile_k * tile_n * w_itemsize > vmem_budget // 3:
        tile_n = max(_LANE, _round_up(tile_n // 2, _LANE))

    # --- Keep the whole weight resident across the grid when it fits. ------
    weight_resident = (grid_k > 1 and tile_n == n_pad
                       and 2 * k_dim * n_pad * w_itemsize <= vmem_budget // 3)

    # --- M tiling from what is left of the budget. --------------------------
    if weight_resident:
        resident = 2 * k_dim * n_pad * w_itemsize + 2 * tile_n * 4
    else:
        resident = 2 * tile_k * tile_n * w_itemsize + 2 * tile_n * 4
    per_row = (2 * tile_k * x_itemsize
               + 2 * tile_n * out_itemsize
               + (tile_n * 4 if grid_k > 1 else 0))
    rows = max(row_mult, (vmem_budget - resident) // per_row)   # guard <= 0
    rows = min(rows, max_tile_m)
    if rows >= _LANE:
        tile_m = (rows // _LANE) * _LANE        # MXU-friendly 128-aligned M
    else:
        tile_m = (rows // row_mult) * row_mult

    batch_aligned = _round_up(batch, row_mult)
    # Enough M steps to overlap DMA/compute and feed both v7x TensorCores:
    # ~8 steps (>= 3-4 per core, tile_m >= 256) on large batches, else >= 2.
    if batch_aligned >= 8 * 256:
        tile_m = min(tile_m, max(256, _round_up(_cdiv(batch_aligned, 8), _LANE)))
    elif batch_aligned >= 2 * _LANE:
        tile_m = min(tile_m, _round_up(_cdiv(batch_aligned, 2), row_mult))
    tile_m = max(row_mult, min(tile_m, batch_aligned))

    return tile_m, tile_k, tile_n, weight_resident


# --------------------------------------------------------------------------
# Parameter preparation + wrappers
# --------------------------------------------------------------------------

def prepare_linear_probe_params(weight, bias, *, compute_dtype=None):
    """Pad num_classes to a multiple of 128 and pre-transpose the weight ONCE.

    Call this outside the hot path and reuse the result for repeated probe
    evaluation. compute_dtype=jnp.bfloat16 enables the bf16-operand MXU fast
    path on ALL generations (v5e/v6e/v7x MXUs are natively bf16); accumulation
    and the bias add stay f32 inside the kernel.
    Returns (w_prepared [k_pad, n_pad], bias_prepared [1, n_pad] float32).
    """
    num_classes, input_dim = weight.shape
    n_pad = _round_up(num_classes, _LANE)
    # Zero-pad K to a 128 multiple whenever the kernel will split K, so the
    # K grid axis is always expressible (zero columns contribute nothing).
    k_pad = (_round_up(input_dim, _LANE)
             if input_dim > _K_SPLIT_THRESHOLD else input_dim)
    w = weight.astype(compute_dtype) if compute_dtype is not None else weight
    w_p = jnp.pad(w, ((0, n_pad - num_classes), (0, k_pad - input_dim))).T
    b_p = jnp.pad(bias.astype(jnp.float32),
                  (0, n_pad - num_classes)).reshape(1, n_pad)
    return w_p, b_p


def linear_probe_prepared(x, w_p, b_p, *, num_classes=None):
    """y = x @ W.T + b using pre-prepared (padded, transposed) parameters."""
    batch, input_dim = x.shape
    k_pad, n_pad = w_p.shape
    assert k_pad >= input_dim, "prepared weight does not match x's input_dim"
    if num_classes is None:
        num_classes = n_pad
    out_dtype = x.dtype

    # Matmul operands take the weight's dtype (bf16 fast path on any gen);
    # accumulation and bias add stay f32 inside the kernel.
    x_c = x.astype(w_p.dtype) if x.dtype != w_p.dtype else x
    if k_pad != input_dim:
        x_c = jnp.pad(x_c, ((0, 0), (0, k_pad - input_dim)))

    vmem_limit, vmem_budget, max_tile_m = _vmem_config()
    tile_m, tile_k, tile_n, weight_resident = _select_tiles(
        batch, k_pad, n_pad, x_c.dtype.itemsize, w_p.dtype.itemsize,
        jnp.dtype(out_dtype).itemsize, vmem_budget, max_tile_m)

    # Rare (very large num_classes): pad N further so tile_n divides it.
    if n_pad % tile_n:
        extra = _round_up(n_pad, tile_n) - n_pad
        w_p = jnp.pad(w_p, ((0, 0), (0, extra)))
        b_p = jnp.pad(b_p, ((0, 0), (0, extra)))
        n_pad += extra

    # Ragged batch: zero-pad rows to a multiple of tile_m, slice afterwards.
    batch_pad = _round_up(batch, tile_m)
    if batch_pad != batch:
        x_c = jnp.pad(x_c, ((0, batch_pad - batch), (0, 0)))

    grid_m = batch_pad // tile_m
    grid_n = n_pad // tile_n
    grid_k = k_pad // tile_k

    # Cost estimate: count weight re-streaming when it is not resident.
    x_bytes = batch_pad * k_pad * x_c.dtype.itemsize
    w_bytes = k_pad * n_pad * w_p.dtype.itemsize
    out_bytes = batch_pad * n_pad * jnp.dtype(out_dtype).itemsize
    w_fetches = 1 if (weight_resident or grid_m == 1
                      or (grid_n == 1 and grid_k == 1)) else grid_m
    cost = pl.CostEstimate(
        flops=2 * batch_pad * k_pad * n_pad,
        transcendentals=0,
        bytes_accessed=x_bytes + w_fetches * w_bytes + n_pad * 4 + out_bytes)

    if grid_k == 1:
        # Fast path: no accumulator scratch, no zero-init, no acc round trip.
        kernel = _fused_kernel
        grid = (grid_m, grid_n)
        in_specs = [
            pl.BlockSpec((tile_m, k_pad), lambda i, j: (i, 0)),    # x tile
            pl.BlockSpec((k_pad, tile_n), lambda i, j: (0, j)),    # weight
            pl.BlockSpec((1, tile_n), lambda i, j: (0, j)),        # bias
        ]
        out_spec = pl.BlockSpec((tile_m, tile_n), lambda i, j: (i, j))
        scratch_shapes = []
        dim_sem = ("parallel", "parallel")
    else:
        grid = (grid_m, grid_n, grid_k)
        if weight_resident:
            kernel = functools.partial(_ksplit_resident_kernel, tile_k=tile_k)
            w_spec = pl.BlockSpec((k_pad, n_pad), lambda i, j, k: (0, 0))
        else:
            kernel = _ksplit_kernel
            w_spec = pl.BlockSpec((tile_k, tile_n), lambda i, j, k: (k, j))
        in_specs = [
            pl.BlockSpec((tile_m, tile_k), lambda i, j, k: (i, k)),  # x tile
            w_spec,                                                  # weight
            pl.BlockSpec((1, tile_n), lambda i, j, k: (0, j)),       # bias
        ]
        out_spec = pl.BlockSpec((tile_m, tile_n), lambda i, j, k: (i, j))
        scratch_shapes = [pltpu.VMEM((tile_m, tile_n), jnp.float32)]
        dim_sem = ("parallel", "parallel", "arbitrary")

    out = pl.pallas_call(
        kernel,
        out_shape=jax.ShapeDtypeStruct((batch_pad, n_pad), out_dtype),
        grid_spec=pltpu.PrefetchScalarGridSpec(
            num_scalar_prefetch=0,
            grid=grid,
            in_specs=in_specs,
            out_specs=out_spec,
            scratch_shapes=scratch_shapes,
        ),
        compiler_params=pltpu.CompilerParams(
            dimension_semantics=dim_sem,
            vmem_limit_bytes=vmem_limit,
        ),
        cost_estimate=cost,
    )(x_c, w_p, b_p)

    return out[:batch, :num_classes]


def linear_probe(x, weight, bias, *, compute_dtype=None):
    """Convenience wrapper: y = x @ weight.T + bias (torch nn.Linear layout).

    compute_dtype=jnp.bfloat16 enables the bf16-operand MXU fast path on all
    TPU generations (~1e-2 relative difference vs the f32 reference).
    """
    num_classes = weight.shape[0]
    w_p, b_p = prepare_linear_probe_params(weight, bias,
                                           compute_dtype=compute_dtype)
    return linear_probe_prepared(x, w_p, b_p, num_classes=num_classes)


if __name__ == "__main__":
    key = jax.random.PRNGKey(0)
    k_x, k_w, k_b, k_x2, k_w2, k_b2 = jax.random.split(key, 6)

    # Small shapes consistent with the module's forward: x is [batch, input_dim].
    batch, input_dim, num_classes = 16, 32, 8

    x = jax.random.normal(k_x, (batch, input_dim), dtype=jnp.float32)
    bound = 1.0 / (input_dim ** 0.5)
    weight = jax.random.uniform(k_w, (num_classes, input_dim),
                                minval=-bound, maxval=bound, dtype=jnp.float32)
    bias = jax.random.uniform(k_b, (num_classes,),
                              minval=-bound, maxval=bound, dtype=jnp.float32)
    ref = x @ weight.T + bias

    # 1) Default f32 path (fused grid_k==1 kernel): matches torch numerics.
    out = jax.block_until_ready(linear_probe(x, weight, bias))
    assert out.shape == (batch, num_classes)
    assert jnp.allclose(out, ref, atol=1e-5, rtol=1e-5)

    # 2) bf16-operand MXU fast path (all generations); f32 accumulation + bias.
    out_bf16 = jax.block_until_ready(
        linear_probe(x, weight, bias, compute_dtype=jnp.bfloat16))
    assert out_bf16.shape == (batch, num_classes)
    assert jnp.allclose(out_bf16, ref, atol=5e-2, rtol=5e-2)

    # 3) Large-K path: K grid axis + resident weight + f32 accumulator scratch.
    big_k = 8192
    x2 = jax.random.normal(k_x2, (batch, big_k), dtype=jnp.float32)
    bound2 = 1.0 / (big_k ** 0.5)
    weight2 = jax.random.uniform(k_w2, (num_classes, big_k),
                                 minval=-bound2, maxval=bound2, dtype=jnp.float32)
    bias2 = jax.random.uniform(k_b2, (num_classes,),
                               minval=-bound2, maxval=bound2, dtype=jnp.float32)
    ref2 = jnp.dot(x2, weight2.T, precision=jax.lax.Precision.HIGHEST) + bias2
    out2 = jax.block_until_ready(linear_probe(x2, weight2, bias2))
    assert out2.shape == (batch, num_classes)
    assert jnp.allclose(out2, ref2, atol=2e-2, rtol=2e-2)

    print("KERNEL_OK")
</pallas_src>

<mosaic_0001>
module attributes {stable_mosaic.version = 11 : i64} {
  func.func @_fused_kernel(%arg0: i32, %arg1: i32, %arg2: memref<16x32xf32, #tpu.memory_space<vmem>>, %arg3: memref<32x128xf32, #tpu.memory_space<vmem>>, %arg4: memref<1x128xf32, #tpu.memory_space<vmem>>, %arg5: memref<16x128xf32, #tpu.memory_space<vmem>>) attributes {dimension_semantics = [#tpu.dimension_semantics<parallel>, #tpu.dimension_semantics<parallel>], iteration_bounds = array<i64: 1, 1>, scalar_prefetch = 0 : i64, scratch_operands = 0 : i64, tpu.core_type = #tpu.core_type<tc>, window_params = [{transform_indices = @transform_0, window_bounds = array<i64: 16, 32>}, {transform_indices = @transform_1, window_bounds = array<i64: 32, 128>}, {transform_indices = @transform_2, window_bounds = array<i64: 1, 128>}, {transform_indices = @transform_3, window_bounds = array<i64: 16, 128>}]} {
    %c0 = arith.constant 0 : index
    %c0_0 = arith.constant 0 : index
    %0 = vector.load %arg2[%c0, %c0_0] : memref<16x32xf32, #tpu.memory_space<vmem>>, vector<16x32xf32>
    %c0_1 = arith.constant 0 : index
    %c0_2 = arith.constant 0 : index
    %1 = vector.load %arg3[%c0_1, %c0_2] : memref<32x128xf32, #tpu.memory_space<vmem>>, vector<32x128xf32>
    %cst = arith.constant dense<0.000000e+00> : vector<16x128xf32>
    %2 = tpu.matmul %0, %1, %cst {dimension_numbers = #tpu.dot_dimension_numbers<[1], [0], [0], [1], [0, 0, 1, 1], [], []>} : vector<16x32xf32>, vector<32x128xf32>, vector<16x128xf32> -> vector<16x128xf32>
    %c0_3 = arith.constant 0 : index
    %c0_4 = arith.constant 0 : index
    %3 = vector.load %arg4[%c0_3, %c0_4] : memref<1x128xf32, #tpu.memory_space<vmem>>, vector<1x128xf32>
    %4 = vector.broadcast %3 : vector<1x128xf32> to vector<16x128xf32>
    %5 = arith.addf %2, %4 : vector<16x128xf32>
    %c0_5 = arith.constant 0 : index
    %c0_6 = arith.constant 0 : index
    %6 = vector.load %arg5[%c0_5, %c0_6] : memref<16x128xf32, #tpu.memory_space<vmem>>, vector<16x128xf32>
    tpu.vector_store %arg5[%c0_5, %c0_6], %5 {strides = array<i32>} : memref<16x128xf32, #tpu.memory_space<vmem>>, vector<16x128xf32>,
    return
  }
  func.func @transform_0(%arg0: i32, %arg1: i32) -> (i32, i32) {
    %c0_i32 = arith.constant 0 : i32
    %c0_i32_0 = arith.constant 0 : i32
    return %arg0, %c0_i32 : i32, i32
  }
  func.func @transform_1(%arg0: i32, %arg1: i32) -> (i32, i32) {
    %c0_i32 = arith.constant 0 : i32
    %c0_i32_0 = arith.constant 0 : i32
    return %c0_i32, %arg1 : i32, i32
  }
  func.func @transform_2(%arg0: i32, %arg1: i32) -> (i32, i32) {
    %c0_i32 = arith.constant 0 : i32
    %c0_i32_0 = arith.constant 0 : i32
    return %c0_i32, %arg1 : i32, i32
  }
  func.func @transform_3(%arg0: i32, %arg1: i32) -> (i32, i32) {
    %c0_i32 = arith.constant 0 : i32
    return %arg0, %arg1 : i32, i32
  }
}

</mosaic_0001>

<llo_original>
// kernel: tpu_custom_call.1
$region0: #{tpu_custom_call.1}
  #allocation0 [shape = 'u32[]', space=smem, size = 0x4, offset = 0x4, fixed_abs, tag = 'smem constant byte address 0x4 - core index']
  #allocation1 [shape = 'u32[144,128]{1,0:T(1,128)}', space=vmem, size = 0x12000, scoped, tag = 'internal scratch']
  %s0 = inlined_call_operand.hbm [shape: f32[16,32], index: 0, kind: input, shape index: {}]
  %s1 = inlined_call_operand.hbm [shape: f32[32,128], index: 1, kind: input, shape index: {}]
  %s2 = inlined_call_operand.vmem [shape: f32[1,128], index: 2, kind: input, shape index: {}]
  %s3 = inlined_call_operand.hbm [shape: f32[16,128], index: 3, kind: output, shape index: {}]
  %s4 = sld [smem:[#allocation0]]
  $region30: #{tpu_custom_call.1} parent=0
    _
  %s6 = ssub.s32 1, %s4
  %s7 = scalar_select 0, %s6, %s4
  $region1: #{tpu_custom_call.1} parent=0
    #allocation2 [shape = 'u8[8192]{0}', space=vmem, size = 0x2000, scoped, tag = 'input window, operand 0, single buffered']
    #allocation3 [shape = 's32[1]{0}', space=sflag, size = 0x4, scoped, tag = 'scoped memory for tpu_custom_call.1']
    #allocation4 [shape = 's32[1]{0}', space=sflag, size = 0x4, scoped, tag = 'scoped memory for tpu_custom_call.1']
    #allocation5 [shape = 'u8[16384]{0}', space=vmem, size = 0x4000, scoped, tag = 'input window, operand 1, single buffered']
    #allocation6 [shape = 's32[1]{0}', space=sflag, size = 0x4, scoped, tag = 'scoped memory for tpu_custom_call.1']
    #allocation7 [shape = 'u8[8192]{0}', space=vmem, size = 0x2000, scoped, tag = 'output window, operand 0, single buffered']
    %8 = vsyncpa [#allocation3], 0
    %9 = vsyncpa [#allocation6], 0
    %10 = vsyncpa [#allocation4], 0
    // Predicated region
    $region2: #{tpu_custom_call.1} parent=1 // pred_check
      _
    $region3: #{tpu_custom_call.1} parent=1 // pred_check_branch
      %12 = sbr.rel (0) target = $region5
    $region4: #{tpu_custom_call.1} parent=1 // pred_region
      %s14 = ssub.s32 256, 256
      %15 = vsyncadd [#allocation3], %s14
      %s16 = sshll.u32 [#allocation2], 4
      %s17 = int_to_ptr.vmem [resolvable:$true] %s16
      %22 = dma.hbm_to_vmem [thread:$0]  %s0, 256, %s17, [#allocation3], 128, 128, 8
    $region5: #{tpu_custom_call.1} parent=1 // pred_fallthru
      _
    // Predicated region
    $region6: #{tpu_custom_call.1} parent=1 // pred_check
      _
    $region7: #{tpu_custom_call.1} parent=1 // pred_check_branch
      %24 = sbr.rel (0) target = $region9
    $region8: #{tpu_custom_call.1} parent=1 // pred_region
      %s26 = ssub.s32 512, 512
      %27 = vsyncadd [#allocation6], %s26
      %s28 = sshll.u32 [#allocation5], 4
      %s29 = int_to_ptr.vmem [resolvable:$true] %s28
      %34 = dma.hbm_to_vmem [thread:$0]  %s1, 512, %s29, [#allocation6], 128, 128, 8
    $region9: #{tpu_custom_call.1} parent=1 // pred_fallthru
      _
    // Predicated region
    $region10: #{tpu_custom_call.1} parent=1 // pred_check
      _
    $region11: #{tpu_custom_call.1} parent=1 // pred_check_branch
      %36 = sbr.rel (0) target = $region13
    $region12: #{tpu_custom_call.1} parent=1 // pred_region
      _
    $region13: #{tpu_custom_call.1} parent=1 // pred_fallthru
      _
    // Predicated region
    $region14: #{tpu_custom_call.1} parent=1 // pred_check
      _
    $region15: #{tpu_custom_call.1} parent=1 // pred_check_branch
      %38 = sbr.rel (0) target = $region17
    $region16: #{tpu_custom_call.1} parent=1 // pred_region
      %39 = dma.done [#allocation3], 256
    $region17: #{tpu_custom_call.1} parent=1 // pred_fallthru
      _
    // Predicated region
    $region18: #{tpu_custom_call.1} parent=1 // pred_check
      _
    $region19: #{tpu_custom_call.1} parent=1 // pred_check_branch
      %41 = sbr.rel (0) target = $region21
    $region20: #{tpu_custom_call.1} parent=1 // pred_region
      %42 = dma.done [#allocation6], 512
    $region21: #{tpu_custom_call.1} parent=1 // pred_fallthru
      _
    %v43 = vld [vmem:[#allocation2] sm:$0xff]
    %v44 = vld [vmem:[#allocation2 + $0x8] sm:$0xff]
    %v45 = vld [vmem:[#allocation5] sm:$0xff]
    %v46 = vld [vmem:[#allocation5 + $0x8] sm:$0xff]
    %v47 = vld [vmem:[#allocation5 + $0x10] sm:$0xff]
    %v48 = vld [vmem:[#allocation5 + $0x18] sm:$0xff]
    %v49 = vld [vmem:[%s2] sm:$0x1]
    %v51 = vlaneseq
    %v52 = vshrl.u32 %v51, 7
    %v53 = vsub.s32 0, %v52
    %v54 = vrot.slane %v49, %v53
    %vm56 = vcmask 261120
    %v58 = vsel %vm56, %v43, 0
    %v61 = vsel %vm56, %v44, 0
    %63 = vmatprep.subr.mxu0 0.0
    %64 = vmatpush1.msra.mxu0 0.0
    %65 = vmatprep.subr.mxu0 0.0
    %66 = vmatpush1.msra.mxu0 0.0
    %67 = vmatprep.subr.mxu0 0.0
    %68 = vmatpush1.msra.mxu0 0.0
    %69 = vmatprep.subr.mxu0 0.0
    %70 = vmatpush1.msra.mxu0 0.0
    %71 = vmatprep.subr.mxu0 0.0
    %72 = vmatpush1.msra.mxu0 0.0
    %73 = vmatprep.subr.mxu0 0.0
    %74 = vmatpush1.msra.mxu0 0.0
    %75 = vmatprep.subr.mxu0 0.0
    %76 = vmatpush1.msra.mxu0 0.0
    %77 = vmatprep.subr.mxu0 0.0
    %78 = vmatpush1.msra.mxu0 0.0
    %79 = vmatprep.subr.mxu0 0.0
    %80 = vmatpush1.msra.mxu0 0.0
    %81 = vmatprep.subr.mxu0 0.0
    %82 = vmatpush1.msra.mxu0 0.0
    %83 = vmatprep.subr.mxu0 0.0
    %84 = vmatpush1.msra.mxu0 0.0
    %85 = vmatprep.subr.mxu0 0.0
    %86 = vmatpush1.msra.mxu0 0.0
    %87 = vmatprep.subr.mxu0 0.0
    %88 = vmatpush1.msra.mxu0 %v48
    %89 = vmatprep.subr.mxu0 0.0
    %90 = vmatpush1.msra.mxu0 %v47
    %91 = vmatprep.subr.mxu0 0.0
    %92 = vmatpush1.msra.mxu0 %v46
    %93 = vmatprep.subr.mxu0 0.0
    %94 = vmatpush1.msra.mxu0 %v45
    %95 = vmatprep.subr.mxu0 0.0
    %96 = vmatpush2.msra.mxu0 0.0
    %97 = vmatprep.subr.mxu0 0.0
    %98 = vmatpush2.msra.mxu0 0.0
    %99 = vmatprep.subr.mxu0 0.0
    %100 = vmatpush2.msra.mxu0 0.0
    %101 = vmatprep.subr.mxu0 0.0
    %102 = vmatpush2.msra.mxu0 0.0
    %103 = vmatprep.subr.mxu0 0.0
    %104 = vmatpush2.msra.mxu0 0.0
    %105 = vmatprep.subr.mxu0 0.0
    %106 = vmatpush2.msra.mxu0 0.0
    %107 = vmatprep.subr.mxu0 0.0
    %108 = vmatpush2.msra.mxu0 0.0
    %109 = vmatprep.subr.mxu0 0.0
    %110 = vmatpush2.msra.mxu0 0.0
    %111 = vmatprep.subr.mxu0 0.0
    %112 = vmatpush2.msra.mxu0 0.0
    %113 = vmatprep.subr.mxu0 0.0
    %114 = vmatpush2.msra.mxu0 0.0
    %115 = vmatprep.subr.mxu0 0.0
    %116 = vmatpush2.msra.mxu0 0.0
    %117 = vmatprep.subr.mxu0 0.0
    %118 = vmatpush2.msra.mxu0 0.0
    %119 = vmatprep.subr.mxu0 0.0
    %120 = vmatpush2.msra.mxu0 0.0
    %121 = vmatprep.subr.mxu0 0.0
    %122 = vmatpush2.msra.mxu0 0.0
    %123 = vmatprep.subr.mxu0 0.0
    %124 = vmatpush2.msra.mxu0 0.0
    %125 = vmatprep.subr.mxu0 0.0
    %126 = vmatpush2.msra.mxu0 0.0
    %127 = vmatprep.mubr.f32.mxu0 0.0
    %128 = vmatmul.mubr.f32.gmra.mxu0 %v58
    %v129 = vpop.f32.mrf.mxu0
    %v130 = vadd.f32 %v54, %v129
    %v131 = vpop.f32.mrf.mxu0
    %132 = vmatprep.mubr.f32.mxu0 0.0
    %133 = vmatmul.mubr.f32.gmra.mxu0 %v61
    %v134 = vpop.f32.mrf.mxu0
    %v135 = vadd.f32 %v54, %v134
    %v136 = vpop.f32.mrf.mxu0
    %137 = vdwg.mxu0
    %138 = vst [vmem:[#allocation7] sm:$0xff] %v130
    %139 = vst [vmem:[#allocation7 + $0x8] sm:$0xff] %v135
    // Predicated region
    $region22: #{tpu_custom_call.1} parent=1 // pred_check
      _
    $region23: #{tpu_custom_call.1} parent=1 // pred_check_branch
      %141 = sbr.rel (0) target = $region25
    $region24: #{tpu_custom_call.1} parent=1 // pred_region
      %s143 = ssub.s32 256, 256
      %144 = vsyncadd [#allocation4], %s143
      %s145 = sshll.u32 [#allocation7], 4
      %s146 = int_to_ptr.vmem [resolvable:$true] %s145
      %151 = dma.vmem_to_hbm [thread:$0]  %s146, 256, %s3, [#allocation4], 128, 128, 8
    $region25: #{tpu_custom_call.1} parent=1 // pred_fallthru
      _
    // Predicated region
    $region26: #{tpu_custom_call.1} parent=1 // pred_check
      _
    $region27: #{tpu_custom_call.1} parent=1 // pred_check_branch
      %153 = sbr.rel (0) target = $region29
    $region28: #{tpu_custom_call.1} parent=1 // pred_region
      %154 = dma.done [#allocation4], 256
    $region29: #{tpu_custom_call.1} parent=1 // pred_fallthru
      _
    %155 = vsyncpa [#allocation3], 1
    %156 = vsyncpa [#allocation6], 1
    %157 = vsyncpa [#allocation4], 1

</llo_original>
